<compile_context>
chip_gen: v6e
topology: v6e:2x2x1
jax: 0.10.0
libtpu: 0.0.40
codegen_flags: <defaults>
</compile_context>

<pallas_src>
import functools

import jax
import jax.numpy as jnp
from jax.experimental import pallas as pl
from jax.experimental.pallas import tpu as pltpu


def valuenet_kernel(x_ref, w1_ref, b1_ref, w2_ref, b2_ref, o_ref, *, fc1_on_mxu):
    # Per grid step (batch tile TB on the sublane axis):
    #   x_ref:  (TB, S)  input tile, natural layout
    #   w1_ref: (S, H)   fc1 weight (VMEM-resident across the grid)
    #   b1_ref: (1, H)   fc1 bias   (broadcasts over rows)
    #   w2_ref: (H, 1)   fc2 weight column (VMEM-resident)
    #   b2_ref: (1, 1)   fc2 bias, scalar in SMEM
    #   o_ref:  (TB, 1)  output tile
    x = x_ref[...]                    # (TB, S) f32
    w1 = w1_ref[...]                  # (S, H)  f32

    if fc1_on_mxu:
        # Opt-in (v6e/v7x benchmark): (TB, S) @ (S, H) on the MXU; bias + ReLU
        # stay on the VPU.
        acc = jnp.dot(x, w1, preferred_element_type=jnp.float32) + b1_ref[...]
    else:
        # fc1 as `state_dim` broadcast FMAs on the VPU: a K=4 MXU contraction
        # would only fill 4/128 (v5e) or 4/256 (v6e/v7x) of the systolic
        # depth.  b1 is folded into the first term (saves one full (TB, H)
        # elementwise pass on the binding VALU slot).
        s_dim = x.shape[1]            # static (state_dim)
        acc = b1_ref[...] + x[:, 0:1] * w1[0:1, :]            # (TB, H)
        for s in range(1, s_dim):
            acc = acc + x[:, s:s + 1] * w1[s:s + 1, :]

    h = jnp.maximum(acc, 0.0)                                  # ReLU, (TB, H) f32

    # fc2: full K=H contraction on the MXU, (TB, H) @ (H, 1) -> (TB, 1).
    v = jnp.dot(h, w2_ref[...], preferred_element_type=jnp.float32)
    o_ref[...] = v + b2_ref[0, 0]                              # out dtype is f32


def value_net_forward(x, w1, b1, w2, b2, *, block_b=8192, fc1_on_mxu=False):
    """ValueNet forward: relu(x @ w1 + b1) @ w2 + b2 -> (B, 1) float32.

    x:  (B, S)    w1: (S, H)    b1: (H,)    w2: (H, 1)    b2: (1,) or scalar
    block_b:    batch-tile cap (rounded to a multiple of 128).  Default 8192
                => typical PPO batches run in one grid step.
    fc1_on_mxu: run fc1 on the MXU instead of the VPU (benchmark on v6e/v7x;
                keep False on v5e).
    """
    B, S = x.shape
    H = w1.shape[1]

    def round_up(n, m):
        return ((n + m - 1) // m) * m

    # One grid step whenever B <= block_b; otherwise tile the batch.
    TB = min(round_up(B, 128), round_up(block_b, 128))
    grid = (pl.cdiv(B, TB),)

    # Constant-sized parameter reshapes only; no relayout passes over x.
    w1_f = jnp.asarray(w1, jnp.float32)                         # (S, H)
    b1_r = jnp.asarray(b1, jnp.float32).reshape(1, H)           # (1, H)
    w2_c = jnp.asarray(w2, jnp.float32).reshape(H, 1)           # (H, 1)
    b2_s = jnp.asarray(b2, jnp.float32).reshape(1, 1)           # (1, 1) -> SMEM

    kernel = functools.partial(valuenet_kernel, fc1_on_mxu=fc1_on_mxu)

    return pl.pallas_call(
        kernel,
        out_shape=jax.ShapeDtypeStruct((B, 1), jnp.float32),
        grid=grid,
        in_specs=[
            pl.BlockSpec((TB, S), lambda i: (i, 0)),             # batch-tiled x (ragged last block masked)
            pl.BlockSpec((S, H), lambda i: (0, 0)),              # weights VMEM-resident across the grid
            pl.BlockSpec((1, H), lambda i: (0, 0)),
            pl.BlockSpec((H, 1), lambda i: (0, 0)),
            pl.BlockSpec(memory_space=pltpu.MemorySpace.SMEM),   # scalar fc2 bias
        ],
        out_specs=pl.BlockSpec((TB, 1), lambda i: (i, 0)),
        compiler_params=pltpu.CompilerParams(
            # TODO(synk): verify plain "parallel" actually splits the batch
            # grid across v7x's two TensorCores; if not, switch this axis to
            # pltpu.CORE_PARALLEL.  With the default single-step grid for
            # B <= block_b this is moot anyway.
            dimension_semantics=("parallel",)),
    )(x, w1_f, b1_r, w2_c, b2_s)


def init_params(key, state_dim, hidden_dim):
    # Mimics torch.nn.Linear default init (U[-1/sqrt(fan_in), +1/sqrt(fan_in)]).
    k1, k2, k3, k4 = jax.random.split(key, 4)
    bound1 = 1.0 / jnp.sqrt(state_dim)
    bound2 = 1.0 / jnp.sqrt(hidden_dim)
    w1 = jax.random.uniform(k1, (state_dim, hidden_dim), jnp.float32, -bound1, bound1)
    b1 = jax.random.uniform(k2, (hidden_dim,), jnp.float32, -bound1, bound1)
    w2 = jax.random.uniform(k3, (hidden_dim, 1), jnp.float32, -bound2, bound2)
    b2 = jax.random.uniform(k4, (1,), jnp.float32, -bound2, bound2)
    return w1, b1, w2, b2


if __name__ == "__main__":
    state_dim = 4      # CartPole-v0 observation dim
    hidden_dim = 128
    batch = 200        # not a multiple of 128 -> exercises the masked ragged block

    key = jax.random.PRNGKey(0)
    kx, kp = jax.random.split(key)
    x = jax.random.normal(kx, (batch, state_dim), jnp.float32)
    w1, b1, w2, b2 = init_params(kp, state_dim, hidden_dim)

    # Reference in plain JAX.
    ref = jnp.maximum(x @ w1 + b1[None, :], 0.0) @ w2 + b2[None, :]

    # Default config: single grid step (TB = 256 covers batch = 200).
    out = jax.block_until_ready(value_net_forward(x, w1, b1, w2, b2))
    assert out.shape == (batch, 1)
    assert jnp.allclose(out, ref, atol=1e-5, rtol=1e-5), float(jnp.max(jnp.abs(out - ref)))

    # Small tile: grid = (2,), last block ragged (rows 200..255 masked).
    out2 = jax.block_until_ready(value_net_forward(x, w1, b1, w2, b2, block_b=128))
    assert jnp.allclose(out2, ref, atol=1e-5, rtol=1e-5), float(jnp.max(jnp.abs(out2 - ref)))

    print("KERNEL_OK")
</pallas_src>

<mosaic_0001>
module attributes {stable_mosaic.version = 11 : i64} {
  func.func @valuenet_kernel(%arg0: i32, %arg1: memref<256x4xf32, #tpu.memory_space<vmem>>, %arg2: memref<4x128xf32, #tpu.memory_space<vmem>>, %arg3: memref<1x128xf32, #tpu.memory_space<vmem>>, %arg4: memref<128x1xf32, #tpu.memory_space<vmem>>, %arg5: memref<1x1xf32, #tpu.memory_space<smem>>, %arg6: memref<256x1xf32, #tpu.memory_space<vmem>>) attributes {dimension_semantics = [#tpu.dimension_semantics<parallel>], iteration_bounds = array<i64: 1>, scalar_prefetch = 0 : i64, scratch_operands = 0 : i64, tpu.core_type = #tpu.core_type<tc>, window_params = [{transform_indices = @transform_0, window_bounds = array<i64: 256, 4>}, {pipeline_mode = #tpu.pipeline_mode<synchronous>, transform_indices = @transform_1, window_bounds = array<i64: 4, 128>}, {pipeline_mode = #tpu.pipeline_mode<synchronous>, transform_indices = @transform_2, window_bounds = array<i64: 1, 128>}, {pipeline_mode = #tpu.pipeline_mode<synchronous>, transform_indices = @transform_3, window_bounds = array<i64: 128, 1>}, {transform_indices = @transform_4, window_bounds = array<i64: 1, 1>}, {transform_indices = @transform_5, window_bounds = array<i64: 256, 1>}]} {
    %c0 = arith.constant 0 : index
    %c0_0 = arith.constant 0 : index
    %0 = vector.load %arg1[%c0, %c0_0] : memref<256x4xf32, #tpu.memory_space<vmem>>, vector<256x4xf32>
    %c0_1 = arith.constant 0 : index
    %c0_2 = arith.constant 0 : index
    %1 = vector.load %arg2[%c0_1, %c0_2] : memref<4x128xf32, #tpu.memory_space<vmem>>, vector<4x128xf32>
    %c0_3 = arith.constant 0 : index
    %c0_4 = arith.constant 0 : index
    %2 = vector.load %arg3[%c0_3, %c0_4] : memref<1x128xf32, #tpu.memory_space<vmem>>, vector<1x128xf32>
    %3 = vector.extract_strided_slice %0 {offsets = [0, 0], sizes = [256, 1], strides = [1, 1]} : vector<256x4xf32> to vector<256x1xf32>
    %4 = vector.extract_strided_slice %1 {offsets = [0, 0], sizes = [1, 128], strides = [1, 1]} : vector<4x128xf32> to vector<1x128xf32>
    %5 = vector.broadcast %3 : vector<256x1xf32> to vector<256x128xf32>
    %6 = vector.broadcast %4 : vector<1x128xf32> to vector<256x128xf32>
    %7 = arith.mulf %5, %6 : vector<256x128xf32>
    %8 = vector.broadcast %2 : vector<1x128xf32> to vector<256x128xf32>
    %9 = arith.addf %8, %7 : vector<256x128xf32>
    %10 = vector.extract_strided_slice %0 {offsets = [0, 1], sizes = [256, 1], strides = [1, 1]} : vector<256x4xf32> to vector<256x1xf32>
    %11 = vector.extract_strided_slice %1 {offsets = [1, 0], sizes = [1, 128], strides = [1, 1]} : vector<4x128xf32> to vector<1x128xf32>
    %12 = vector.broadcast %10 : vector<256x1xf32> to vector<256x128xf32>
    %13 = vector.broadcast %11 : vector<1x128xf32> to vector<256x128xf32>
    %14 = arith.mulf %12, %13 : vector<256x128xf32>
    %15 = arith.addf %9, %14 : vector<256x128xf32>
    %16 = vector.extract_strided_slice %0 {offsets = [0, 2], sizes = [256, 1], strides = [1, 1]} : vector<256x4xf32> to vector<256x1xf32>
    %17 = vector.extract_strided_slice %1 {offsets = [2, 0], sizes = [1, 128], strides = [1, 1]} : vector<4x128xf32> to vector<1x128xf32>
    %18 = vector.broadcast %16 : vector<256x1xf32> to vector<256x128xf32>
    %19 = vector.broadcast %17 : vector<1x128xf32> to vector<256x128xf32>
    %20 = arith.mulf %18, %19 : vector<256x128xf32>
    %21 = arith.addf %15, %20 : vector<256x128xf32>
    %22 = vector.extract_strided_slice %0 {offsets = [0, 3], sizes = [256, 1], strides = [1, 1]} : vector<256x4xf32> to vector<256x1xf32>
    %23 = vector.extract_strided_slice %1 {offsets = [3, 0], sizes = [1, 128], strides = [1, 1]} : vector<4x128xf32> to vector<1x128xf32>
    %24 = vector.broadcast %22 : vector<256x1xf32> to vector<256x128xf32>
    %25 = vector.broadcast %23 : vector<1x128xf32> to vector<256x128xf32>
    %26 = arith.mulf %24, %25 : vector<256x128xf32>
    %27 = arith.addf %21, %26 : vector<256x128xf32>
    %cst = arith.constant 0.000000e+00 : f32
    %28 = vector.broadcast %cst : f32 to vector<256x128xf32>
    %29 = arith.maximumf %27, %28 : vector<256x128xf32>
    %c0_5 = arith.constant 0 : index
    %c0_6 = arith.constant 0 : index
    %30 = vector.load %arg4[%c0_5, %c0_6] : memref<128x1xf32, #tpu.memory_space<vmem>>, vector<128x1xf32>
    %cst_7 = arith.constant dense<0.000000e+00> : vector<256x1xf32>
    %31 = tpu.matmul %29, %30, %cst_7 {dimension_numbers = #tpu.dot_dimension_numbers<[1], [0], [0], [1], [0, 0, 1, 1], [], []>} : vector<256x128xf32>, vector<128x1xf32>, vector<256x1xf32> -> vector<256x1xf32>
    %c0_8 = arith.constant 0 : index
    %c0_9 = arith.constant 0 : index
    %32 = memref.load %arg5[%c0_8, %c0_9] : memref<1x1xf32, #tpu.memory_space<smem>>
    %33 = vector.broadcast %32 : f32 to vector<256x1xf32>
    %34 = arith.addf %31, %33 : vector<256x1xf32>
    %c0_10 = arith.constant 0 : index
    %c0_11 = arith.constant 0 : index
    %35 = vector.load %arg6[%c0_10, %c0_11] : memref<256x1xf32, #tpu.memory_space<vmem>>, vector<256x1xf32>
    tpu.vector_store %arg6[%c0_10, %c0_11], %34 {strides = array<i32>} : memref<256x1xf32, #tpu.memory_space<vmem>>, vector<256x1xf32>,
    return
  }
  func.func @transform_0(%arg0: i32) -> (i32, i32) {
    %c0_i32 = arith.constant 0 : i32
    %c0_i32_0 = arith.constant 0 : i32
    return %arg0, %c0_i32 : i32, i32
  }
  func.func @transform_1(%arg0: i32) -> (i32, i32) {
    %c0_i32 = arith.constant 0 : i32
    %c0_i32_0 = arith.constant 0 : i32
    %c0_i32_1 = arith.constant 0 : i32
    return %c0_i32, %c0_i32_0 : i32, i32
  }
  func.func @transform_2(%arg0: i32) -> (i32, i32) {
    %c0_i32 = arith.constant 0 : i32
    %c0_i32_0 = arith.constant 0 : i32
    %c0_i32_1 = arith.constant 0 : i32
    return %c0_i32, %c0_i32_0 : i32, i32
  }
  func.func @transform_3(%arg0: i32) -> (i32, i32) {
    %c0_i32 = arith.constant 0 : i32
    %c0_i32_0 = arith.constant 0 : i32
    %c0_i32_1 = arith.constant 0 : i32
    return %c0_i32, %c0_i32_0 : i32, i32
  }
  func.func @transform_4(%arg0: i32) -> (i32, i32) {
    %c0_i32 = arith.constant 0 : i32
    %c0_i32_0 = arith.constant 0 : i32
    %c0_i32_1 = arith.constant 0 : i32
    return %c0_i32, %c0_i32_0 : i32, i32
  }
  func.func @transform_5(%arg0: i32) -> (i32, i32) {
    %c0_i32 = arith.constant 0 : i32
    %c0_i32_0 = arith.constant 0 : i32
    return %arg0, %c0_i32 : i32, i32
  }
}

</mosaic_0001>

<llo_original>
// kernel: tpu_custom_call.1
$region0: #{tpu_custom_call.1}
  #allocation0 [shape = 'u32[]', space=smem, size = 0x4, offset = 0x4, fixed_abs, tag = 'smem constant byte address 0x4 - core index']
  #allocation1 [shape = 'u32[144,128]{1,0:T(1,128)}', space=vmem, size = 0x12000, scoped, tag = 'internal scratch']
  #allocation2 [shape = 'f32[1,1]{1,0:T(1,128)S(6)}', space=smem, size = 0x200, scoped, tag = 'scoped memory for tpu_custom_call.1']
  %s0 = inlined_call_operand.vmem [shape: f32[200,4], index: 0, kind: input, shape index: {}]
  %s1 = inlined_call_operand.vmem [shape: f32[4,128], index: 1, kind: input, shape index: {}]
  %s2 = inlined_call_operand.vmem [shape: f32[1,128], index: 2, kind: input, shape index: {}]
  %s3 = inlined_call_operand.vmem [shape: f32[128,1], index: 3, kind: input, shape index: {}]
  %s4 = inlined_call_operand.<no memory space> [shape: f32[1,1], index: 4, kind: input, shape index: {}]
  %s5 = inlined_call_operand.vmem [shape: f32[200,1], index: 5, kind: output, shape index: {}]
  %s6 = sld [smem:[#allocation0]]
  $region64: #{tpu_custom_call.1} parent=0
    _
  %s8 = ssub.s32 1, %s6
  %s9 = scalar_select 0, %s8, %s6
  %10 = sst [smem:[#allocation2]] %s4
  $region1: #{tpu_custom_call.1} parent=0
    #allocation3 [shape = 'u8[131072]{0}', space=vmem, size = 0x20000, scoped, tag = 'output window, operand 0, single buffered']
    // Predicated region
    $region2: #{tpu_custom_call.1} parent=1 // pred_check
      _
    $region3: #{tpu_custom_call.1} parent=1 // pred_check_branch
      %12 = sbr.rel (0) target = $region5
    $region4: #{tpu_custom_call.1} parent=1 // pred_region
      _
    $region5: #{tpu_custom_call.1} parent=1 // pred_fallthru
      _
    // Predicated region
    $region6: #{tpu_custom_call.1} parent=1 // pred_check
      _
    $region7: #{tpu_custom_call.1} parent=1 // pred_check_branch
      %14 = sbr.rel (0) target = $region9
    $region8: #{tpu_custom_call.1} parent=1 // pred_region
      _
    $region9: #{tpu_custom_call.1} parent=1 // pred_fallthru
      _
    // Predicated region
    $region10: #{tpu_custom_call.1} parent=1 // pred_check
      _
    $region11: #{tpu_custom_call.1} parent=1 // pred_check_branch
      %16 = sbr.rel (0) target = $region13
    $region12: #{tpu_custom_call.1} parent=1 // pred_region
      _
    $region13: #{tpu_custom_call.1} parent=1 // pred_fallthru
      _
    // Predicated region
    $region14: #{tpu_custom_call.1} parent=1 // pred_check
      _
    $region15: #{tpu_custom_call.1} parent=1 // pred_check_branch
      %18 = sbr.rel (0) target = $region17
    $region16: #{tpu_custom_call.1} parent=1 // pred_region
      _
    $region17: #{tpu_custom_call.1} parent=1 // pred_fallthru
      _
    // Predicated region
    $region18: #{tpu_custom_call.1} parent=1 // pred_check
      _
    $region19: #{tpu_custom_call.1} parent=1 // pred_check_branch
      %20 = sbr.rel (0) target = $region21
    $region20: #{tpu_custom_call.1} parent=1 // pred_region
      _
    $region21: #{tpu_custom_call.1} parent=1 // pred_fallthru
      _
    %v21 = vld [vmem:[%s0] sm:$0xff]
    %v22 = vld [vmem:[%s0 + $0x8] sm:$0xff]
    %v23 = vld [vmem:[%s0 + $0x10] sm:$0xff]
    %v24 = vld [vmem:[%s0 + $0x18] sm:$0xff]
    %v25 = vld [vmem:[%s0 + $0x20] sm:$0xff]
    %v26 = vld [vmem:[%s0 + $0x28] sm:$0xff]
    %v27 = vld [vmem:[%s0 + $0x30] sm:$0xff]
    %v28 = vld [vmem:[%s0 + $0x38] sm:$0xff]
    %v29 = vld [vmem:[%s0 + $0x40] sm:$0xff]
    %v30 = vld [vmem:[%s0 + $0x48] sm:$0xff]
    %v31 = vld [vmem:[%s0 + $0x50] sm:$0xff]
    %v32 = vld [vmem:[%s0 + $0x58] sm:$0xff]
    %v33 = vld [vmem:[%s0 + $0x60] sm:$0xff]
    %v34 = vld [vmem:[%s0 + $0x68] sm:$0xff]
    %v35 = vld [vmem:[%s0 + $0x70] sm:$0xff]
    %v36 = vld [vmem:[%s0 + $0x78] sm:$0xff]
    %v37 = vld [vmem:[%s0 + $0x80] sm:$0xff]
    %v38 = vld [vmem:[%s0 + $0x88] sm:$0xff]
    %v39 = vld [vmem:[%s0 + $0x90] sm:$0xff]
    %v40 = vld [vmem:[%s0 + $0x98] sm:$0xff]
    %v41 = vld [vmem:[%s0 + $0xa0] sm:$0xff]
    %v42 = vld [vmem:[%s0 + $0xa8] sm:$0xff]
    %v43 = vld [vmem:[%s0 + $0xb0] sm:$0xff]
    %v44 = vld [vmem:[%s0 + $0xb8] sm:$0xff]
    %v45 = vld [vmem:[%s0 + $0xc0] sm:$0xff]
    %v46 = vld [vmem:[%s0 + $0xc8] sm:$0xff]
    %v47 = vld [vmem:[%s0 + $0xd0] sm:$0xff]
    %v48 = vld [vmem:[%s0 + $0xd8] sm:$0xff]
    %v49 = vld [vmem:[%s0 + $0xe0] sm:$0xff]
    %v50 = vld [vmem:[%s0 + $0xe8] sm:$0xff]
    %v51 = vld [vmem:[%s0 + $0xf0] sm:$0xff]
    %v52 = vld [vmem:[%s0 + $0xf8] sm:$0xff]
    %v53 = vld [vmem:[%s1] sm:$0xf]
    %v54 = vld [vmem:[%s2] sm:$0x1]
    %56 = vset.pattern.permute.xlu0 0
    %57 = vperm.xlu0 %56, %v21
    %v58 = vpop.permute.xlu0 %57
    %61 = vset.pattern.permute.xlu0 0
    %62 = vperm.xlu0 %61, %v22
    %v63 = vpop.permute.xlu0 %62
    %66 = vset.pattern.permute.xlu0 0
    %67 = vperm.xlu0 %66, %v23
    %v68 = vpop.permute.xlu0 %67
    %71 = vset.pattern.permute.xlu0 0
    %72 = vperm.xlu0 %71, %v24
    %v73 = vpop.permute.xlu0 %72
    %76 = vset.pattern.permute.xlu0 0
    %77 = vperm.xlu0 %76, %v25
    %v78 = vpop.permute.xlu0 %77
    %81 = vset.pattern.permute.xlu0 0
    %82 = vperm.xlu0 %81, %v26
    %v83 = vpop.permute.xlu0 %82
    %86 = vset.pattern.permute.xlu0 0
    %87 = vperm.xlu0 %86, %v27
    %v88 = vpop.permute.xlu0 %87
    %91 = vset.pattern.permute.xlu0 0
    %92 = vperm.xlu0 %91, %v28
    %v93 = vpop.permute.xlu0 %92
    %96 = vset.pattern.permute.xlu0 0
    %97 = vperm.xlu0 %96, %v29
    %v98 = vpop.permute.xlu0 %97
    %101 = vset.pattern.permute.xlu0 0
    %102 = vperm.xlu0 %101, %v30
    %v103 = vpop.permute.xlu0 %102
    %106 = vset.pattern.permute.xlu0 0
    %107 = vperm.xlu0 %106, %v31
    %v108 = vpop.permute.xlu0 %107
    %111 = vset.pattern.permute.xlu0 0
    %112 = vperm.xlu0 %111, %v32
    %v113 = vpop.permute.xlu0 %112
    %116 = vset.pattern.permute.xlu0 0
    %117 = vperm.xlu0 %116, %v33
    %v118 = vpop.permute.xlu0 %117
    %121 = vset.pattern.permute.xlu0 0
    %122 = vperm.xlu0 %121, %v34
    %v123 = vpop.permute.xlu0 %122
    %126 = vset.pattern.permute.xlu0 0
    %127 = vperm.xlu0 %126, %v35
    %v128 = vpop.permute.xlu0 %127
    %131 = vset.pattern.permute.xlu0 0
    %132 = vperm.xlu0 %131, %v36
    %v133 = vpop.permute.xlu0 %132
    %136 = vset.pattern.permute.xlu0 0
    %137 = vperm.xlu0 %136, %v37
    %v138 = vpop.permute.xlu0 %137
    %141 = vset.pattern.permute.xlu0 0
    %142 = vperm.xlu0 %141, %v38
    %v143 = vpop.permute.xlu0 %142
    %146 = vset.pattern.permute.xlu0 0
    %147 = vperm.xlu0 %146, %v39
    %v148 = vpop.permute.xlu0 %147
    %151 = vset.pattern.permute.xlu0 0
    %152 = vperm.xlu0 %151, %v40
    %v153 = vpop.permute.xlu0 %152
    %156 = vset.pattern.permute.xlu0 0
    %157 = vperm.xlu0 %156, %v41
    %v158 = vpop.permute.xlu0 %157
    %161 = vset.pattern.permute.xlu0 0
    %162 = vperm.xlu0 %161, %v42
    %v163 = vpop.permute.xlu0 %162
    %166 = vset.pattern.permute.xlu0 0
    %167 = vperm.xlu0 %166, %v43
    %v168 = vpop.permute.xlu0 %167
    %171 = vset.pattern.permute.xlu0 0
    %172 = vperm.xlu0 %171, %v44
    %v173 = vpop.permute.xlu0 %172
    %176 = vset.pattern.permute.xlu0 0
    %177 = vperm.xlu0 %176, %v45
    %v178 = vpop.permute.xlu0 %177
    %181 = vset.pattern.permute.xlu0 0
    %182 = vperm.xlu0 %181, %v46
    %v183 = vpop.permute.xlu0 %182
    %186 = vset.pattern.permute.xlu0 0
    %187 = vperm.xlu0 %186, %v47
    %v188 = vpop.permute.xlu0 %187
    %191 = vset.pattern.permute.xlu0 0
    %192 = vperm.xlu0 %191, %v48
    %v193 = vpop.permute.xlu0 %192
    %196 = vset.pattern.permute.xlu0 0
    %197 = vperm.xlu0 %196, %v49
    %v198 = vpop.permute.xlu0 %197
    %201 = vset.pattern.permute.xlu0 0
    %202 = vperm.xlu0 %201, %v50
    %v203 = vpop.permute.xlu0 %202
    %206 = vset.pattern.permute.xlu0 0
    %207 = vperm.xlu0 %206, %v51
    %v208 = vpop.permute.xlu0 %207
    %211 = vset.pattern.permute.xlu0 0
    %212 = vperm.xlu0 %211, %v52
    %v213 = vpop.permute.xlu0 %212
    %v215 = vlaneseq
    %v216 = vshrl.u32 %v215, 7
    %v217 = vsub.s32 0, %v216
    %v218 = vrot.slane %v53, %v217
    %v219 = vmul.f32 %v58, %v218
    %v220 = vmul.f32 %v63, %v218
    %v221 = vmul.f32 %v68, %v218
    %v222 = vmul.f32 %v73, %v218
    %v223 = vmul.f32 %v78, %v218
    %v224 = vmul.f32 %v83, %v218
    %v225 = vmul.f32 %v88, %v218
    %v226 = vmul.f32 %v93, %v218
    %v227 = vmul.f32 %v98, %v218
    %v228 = vmul.f32 %v103, %v218
    %v229 = vmul.f32 %v108, %v218
    %v230 = vmul.f32 %v113, %v218
    %v231 = vmul.f32 %v118, %v218
    %v232 = vmul.f32 %v123, %v218
    %v233 = vmul.f32 %v128, %v218
    %v234 = vmul.f32 %v133, %v218
    %v235 = vmul.f32 %v138, %v218
    %v236 = vmul.f32 %v143, %v218
    %v237 = vmul.f32 %v148, %v218
    %v238 = vmul.f32 %v153, %v218
    %v239 = vmul.f32 %v158, %v218
    %v240 = vmul.f32 %v163, %v218
    %v241 = vmul.f32 %v168, %v218
    %v242 = vmul.f32 %v173, %v218
    %v243 = vmul.f32 %v178, %v218
    %v244 = vmul.f32 %v183, %v218
    %v245 = vmul.f32 %v188, %v218
    %v246 = vmul.f32 %v193, %v218
    %v247 = vmul.f32 %v198, %v218
    %v248 = vmul.f32 %v203, %v218
    %v249 = vmul.f32 %v208, %v218
    %v250 = vmul.f32 %v213, %v218
    %v252 = vlaneseq
    %v253 = vshrl.u32 %v252, 7
    %v254 = vsub.s32 0, %v253
    %v255 = vrot.slane %v54, %v254
    %v257 = vadd.f32 %v255, %v219
    %v258 = vadd.f32 %v255, %v220
    %v259 = vadd.f32 %v255, %v221
    %v260 = vadd.f32 %v255, %v222
    %v261 = vadd.f32 %v255, %v223
    %v262 = vadd.f32 %v255, %v224
    %v263 = vadd.f32 %v255, %v225
    %v264 = vadd.f32 %v255, %v226
    %v265 = vadd.f32 %v255, %v227
    %v266 = vadd.f32 %v255, %v228
    %v267 = vadd.f32 %v255, %v229
    %v268 = vadd.f32 %v255, %v230
    %v269 = vadd.f32 %v255, %v231
    %v270 = vadd.f32 %v255, %v232
    %v271 = vadd.f32 %v255, %v233
    %v272 = vadd.f32 %v255, %v234
    %v273 = vadd.f32 %v255, %v235
    %v274 = vadd.f32 %v255, %v236
    %v275 = vadd.f32 %v255, %v237
    %v276 = vadd.f32 %v255, %v238
    %v277 = vadd.f32 %v255, %v239
    %v278 = vadd.f32 %v255, %v240
    %v279 = vadd.f32 %v255, %v241
    %v280 = vadd.f32 %v255, %v242
    %v281 = vadd.f32 %v255, %v243
    %v282 = vadd.f32 %v255, %v244
    %v283 = vadd.f32 %v255, %v245
    %v284 = vadd.f32 %v255, %v246
    %v285 = vadd.f32 %v255, %v247
    %v286 = vadd.f32 %v255, %v248
    %v287 = vadd.f32 %v255, %v249
    %v288 = vadd.f32 %v255, %v250
    %289 = vset.pattern.permute.xlu0 1
    %290 = vperm.xlu0 %289, %v21
    %v291 = vpop.permute.xlu0 %290
    %293 = vset.pattern.permute.xlu0 1
    %294 = vperm.xlu0 %293, %v22
    %v295 = vpop.permute.xlu0 %294
    %297 = vset.pattern.permute.xlu0 1
    %298 = vperm.xlu0 %297, %v23
    %v299 = vpop.permute.xlu0 %298
    %301 = vset.pattern.permute.xlu0 1
    %302 = vperm.xlu0 %301, %v24
    %v303 = vpop.permute.xlu0 %302
    %305 = vset.pattern.permute.xlu0 1
    %306 = vperm.xlu0 %305, %v25
    %v307 = vpop.permute.xlu0 %306
    %309 = vset.pattern.permute.xlu0 1
    %310 = vperm.xlu0 %309, %v26
    %v311 = vpop.permute.xlu0 %310
    %313 = vset.pattern.permute.xlu0 1
    %314 = vperm.xlu0 %313, %v27
    %v315 = vpop.permute.xlu0 %314
    %317 = vset.pattern.permute.xlu0 1
    %318 = vperm.xlu0 %317, %v28
    %v319 = vpop.permute.xlu0 %318
    %321 = vset.pattern.permute.xlu0 1
    %322 = vperm.xlu0 %321, %v29
    %v323 = vpop.permute.xlu0 %322
    %325 = vset.pattern.permute.xlu0 1
    %326 = vperm.xlu0 %325, %v30
    %v327 = vpop.permute.xlu0 %326
    %329 = vset.pattern.permute.xlu0 1
    %330 = vperm.xlu0 %329, %v31
    %v331 = vpop.permute.xlu0 %330
    %333 = vset.pattern.permute.xlu0 1
    %334 = vperm.xlu0 %333, %v32
    %v335 = vpop.permute.xlu0 %334
    %337 = vset.pattern.permute.xlu0 1
    %338 = vperm.xlu0 %337, %v33
    %v339 = vpop.permute.xlu0 %338
    %341 = vset.pattern.permute.xlu0 1
    %342 = vperm.xlu0 %341, %v34
    %v343 = vpop.permute.xlu0 %342
    %345 = vset.pattern.permute.xlu0 1
    %346 = vperm.xlu0 %345, %v35
    %v347 = vpop.permute.xlu0 %346
    %349 = vset.pattern.permute.xlu0 1
    %350 = vperm.xlu0 %349, %v36
    %v351 = vpop.permute.xlu0 %350
    %353 = vset.pattern.permute.xlu0 1
    %354 = vperm.xlu0 %353, %v37
    %v355 = vpop.permute.xlu0 %354
    %357 = vset.pattern.permute.xlu0 1
    %358 = vperm.xlu0 %357, %v38
    %v359 = vpop.permute.xlu0 %358
    %361 = vset.pattern.permute.xlu0 1
    %362 = vperm.xlu0 %361, %v39
    %v363 = vpop.permute.xlu0 %362
    %365 = vset.pattern.permute.xlu0 1
    %366 = vperm.xlu0 %365, %v40
    %v367 = vpop.permute.xlu0 %366
    %369 = vset.pattern.permute.xlu0 1
    %370 = vperm.xlu0 %369, %v41
    %v371 = vpop.permute.xlu0 %370
    %373 = vset.pattern.permute.xlu0 1
    %374 = vperm.xlu0 %373, %v42
    %v375 = vpop.permute.xlu0 %374
    %377 = vset.pattern.permute.xlu0 1
    %378 = vperm.xlu0 %377, %v43
    %v379 = vpop.permute.xlu0 %378
    %381 = vset.pattern.permute.xlu0 1
    %382 = vperm.xlu0 %381, %v44
    %v383 = vpop.permute.xlu0 %382
    %385 = vset.pattern.permute.xlu0 1
    %386 = vperm.xlu0 %385, %v45
    %v387 = vpop.permute.xlu0 %386
    %389 = vset.pattern.permute.xlu0 1
    %390 = vperm.xlu0 %389, %v46
    %v391 = vpop.permute.xlu0 %390
    %393 = vset.pattern.permute.xlu0 1
    %394 = vperm.xlu0 %393, %v47
    %v395 = vpop.permute.xlu0 %394
    %397 = vset.pattern.permute.xlu0 1
    %398 = vperm.xlu0 %397, %v48
    %v399 = vpop.permute.xlu0 %398
    %401 = vset.pattern.permute.xlu0 1
    %402 = vperm.xlu0 %401, %v49
    %v403 = vpop.permute.xlu0 %402
    %405 = vset.pattern.permute.xlu0 1
    %406 = vperm.xlu0 %405, %v50
    %v407 = vpop.permute.xlu0 %406
    %409 = vset.pattern.permute.xlu0 1
    %410 = vperm.xlu0 %409, %v51
    %v411 = vpop.permute.xlu0 %410
    %413 = vset.pattern.permute.xlu0 1
    %414 = vperm.xlu0 %413, %v52
    %v415 = vpop.permute.xlu0 %414
    %v417 = vlaneseq
    %v418 = vshrl.u32 %v417, 7
    %v419 = vsub.s32 1, %v418
    %v420 = vrot.slane %v53, %v419
    %v421 = vmul.f32 %v291, %v420
    %v422 = vmul.f32 %v295, %v420
    %v423 = vmul.f32 %v299, %v420
    %v424 = vmul.f32 %v303, %v420
    %v425 = vmul.f32 %v307, %v420
    %v426 = vmul.f32 %v311, %v420
    %v427 = vmul.f32 %v315, %v420
    %v428 = vmul.f32 %v319, %v420
    %v429 = vmul.f32 %v323, %v420
    %v430 = vmul.f32 %v327, %v420
    %v431 = vmul.f32 %v331, %v420
    %v432 = vmul.f32 %v335, %v420
    %v433 = vmul.f32 %v339, %v420
    %v434 = vmul.f32 %v343, %v420
    %v435 = vmul.f32 %v347, %v420
    %v436 = vmul.f32 %v351, %v420
    %v437 = vmul.f32 %v355, %v420
    %v438 = vmul.f32 %v359, %v420
    %v439 = vmul.f32 %v363, %v420
    %v440 = vmul.f32 %v367, %v420
    %v441 = vmul.f32 %v371, %v420
    %v442 = vmul.f32 %v375, %v420
    %v443 = vmul.f32 %v379, %v420
    %v444 = vmul.f32 %v383, %v420
    %v445 = vmul.f32 %v387, %v420
    %v446 = vmul.f32 %v391, %v420
    %v447 = vmul.f32 %v395, %v420
    %v448 = vmul.f32 %v399, %v420
    %v449 = vmul.f32 %v403, %v420
    %v450 = vmul.f32 %v407, %v420
    %v451 = vmul.f32 %v411, %v420
    %v452 = vmul.f32 %v415, %v420
    %v453 = vadd.f32 %v257, %v421
    %v454 = vadd.f32 %v258, %v422
    %v455 = vadd.f32 %v259, %v423
    %v456 = vadd.f32 %v260, %v424
    %v457 = vadd.f32 %v261, %v425
    %v458 = vadd.f32 %v262, %v426
    %v459 = vadd.f32 %v263, %v427
    %v460 = vadd.f32 %v264, %v428
    %v461 = vadd.f32 %v265, %v429
    %v462 = vadd.f32 %v266, %v430
    %v463 = vadd.f32 %v267, %v431
    %v464 = vadd.f32 %v268, %v432
    %v465 = vadd.f32 %v269, %v433
    %v466 = vadd.f32 %v270, %v434
    %v467 = vadd.f32 %v271, %v435
    %v468 = vadd.f32 %v272, %v436
    %v469 = vadd.f32 %v273, %v437
    %v470 = vadd.f32 %v274, %v438
    %v471 = vadd.f32 %v275, %v439
    %v472 = vadd.f32 %v276, %v440
    %v473 = vadd.f32 %v277, %v441
    %v474 = vadd.f32 %v278, %v442
    %v475 = vadd.f32 %v279, %v443
    %v476 = vadd.f32 %v280, %v444
    %v477 = vadd.f32 %v281, %v445
    %v478 = vadd.f32 %v282, %v446
    %v479 = vadd.f32 %v283, %v447
    %v480 = vadd.f32 %v284, %v448
    %v481 = vadd.f32 %v285, %v449
    %v482 = vadd.f32 %v286, %v450
    %v483 = vadd.f32 %v287, %v451
    %v484 = vadd.f32 %v288, %v452
    %485 = vset.pattern.permute.xlu0 2
    %486 = vperm.xlu0 %485, %v21
    %v487 = vpop.permute.xlu0 %486
    %489 = vset.pattern.permute.xlu0 2
    %490 = vperm.xlu0 %489, %v22
    %v491 = vpop.permute.xlu0 %490
    %493 = vset.pattern.permute.xlu0 2
    %494 = vperm.xlu0 %493, %v23
    %v495 = vpop.permute.xlu0 %494
    %497 = vset.pattern.permute.xlu0 2
    %498 = vperm.xlu0 %497, %v24
    %v499 = vpop.permute.xlu0 %498
    %501 = vset.pattern.permute.xlu0 2
    %502 = vperm.xlu0 %501, %v25
    %v503 = vpop.permute.xlu0 %502
    %505 = vset.pattern.permute.xlu0 2
    %506 = vperm.xlu0 %505, %v26
    %v507 = vpop.permute.xlu0 %506
    %509 = vset.pattern.permute.xlu0 2
    %510 = vperm.xlu0 %509, %v27
    %v511 = vpop.permute.xlu0 %510
    %513 = vset.pattern.permute.xlu0 2
    %514 = vperm.xlu0 %513, %v28
    %v515 = vpop.permute.xlu0 %514
    %517 = vset.pattern.permute.xlu0 2
    %518 = vperm.xlu0 %517, %v29
    %v519 = vpop.permute.xlu0 %518
    %521 = vset.pattern.permute.xlu0 2
    %522 = vperm.xlu0 %521, %v30
    %v523 = vpop.permute.xlu0 %522
    %525 = vset.pattern.permute.xlu0 2
    %526 = vperm.xlu0 %525, %v31
    %v527 = vpop.permute.xlu0 %526
    %529 = vset.pattern.permute.xlu0 2
    %530 = vperm.xlu0 %529, %v32
    %v531 = vpop.permute.xlu0 %530
    %533 = vset.pattern.permute.xlu0 2
    %534 = vperm.xlu0 %533, %v33
    %v535 = vpop.permute.xlu0 %534
    %537 = vset.pattern.permute.xlu0 2
    %538 = vperm.xlu0 %537, %v34
    %v539 = vpop.permute.xlu0 %538
    %541 = vset.pattern.permute.xlu0 2
    %542 = vperm.xlu0 %541, %v35
    %v543 = vpop.permute.xlu0 %542
    %545 = vset.pattern.permute.xlu0 2
    %546 = vperm.xlu0 %545, %v36
    %v547 = vpop.permute.xlu0 %546
    %549 = vset.pattern.permute.xlu0 2
    %550 = vperm.xlu0 %549, %v37
    %v551 = vpop.permute.xlu0 %550
    %553 = vset.pattern.permute.xlu0 2
    %554 = vperm.xlu0 %553, %v38
    %v555 = vpop.permute.xlu0 %554
    %557 = vset.pattern.permute.xlu0 2
    %558 = vperm.xlu0 %557, %v39
    %v559 = vpop.permute.xlu0 %558
    %561 = vset.pattern.permute.xlu0 2
    %562 = vperm.xlu0 %561, %v40
    %v563 = vpop.permute.xlu0 %562
    %565 = vset.pattern.permute.xlu0 2
    %566 = vperm.xlu0 %565, %v41
    %v567 = vpop.permute.xlu0 %566
    %569 = vset.pattern.permute.xlu0 2
    %570 = vperm.xlu0 %569, %v42
    %v571 = vpop.permute.xlu0 %570
    %573 = vset.pattern.permute.xlu0 2
    %574 = vperm.xlu0 %573, %v43
    %v575 = vpop.permute.xlu0 %574
    %577 = vset.pattern.permute.xlu0 2
    %578 = vperm.xlu0 %577, %v44
    %v579 = vpop.permute.xlu0 %578
    %581 = vset.pattern.permute.xlu0 2
    %582 = vperm.xlu0 %581, %v45
    %v583 = vpop.permute.xlu0 %582
    %585 = vset.pattern.permute.xlu0 2
    %586 = vperm.xlu0 %585, %v46
    %v587 = vpop.permute.xlu0 %586
    %589 = vset.pattern.permute.xlu0 2
    %590 = vperm.xlu0 %589, %v47
    %v591 = vpop.permute.xlu0 %590
    %593 = vset.pattern.permute.xlu0 2
    %594 = vperm.xlu0 %593, %v48
    %v595 = vpop.permute.xlu0 %594
    %597 = vset.pattern.permute.xlu0 2
    %598 = vperm.xlu0 %597, %v49
    %v599 = vpop.permute.xlu0 %598
    %601 = vset.pattern.permute.xlu0 2
    %602 = vperm.xlu0 %601, %v50
    %v603 = vpop.permute.xlu0 %602
    %605 = vset.pattern.permute.xlu0 2
    %606 = vperm.xlu0 %605, %v51
    %v607 = vpop.permute.xlu0 %606
    %609 = vset.pattern.permute.xlu0 2
    %610 = vperm.xlu0 %609, %v52
    %v611 = vpop.permute.xlu0 %610
    %v613 = vlaneseq
    %v614 = vshrl.u32 %v613, 7
    %v615 = vsub.s32 2, %v614
    %v616 = vrot.slane %v53, %v615
    %v617 = vmul.f32 %v487, %v616
    %v618 = vmul.f32 %v491, %v616
    %v619 = vmul.f32 %v495, %v616
    %v620 = vmul.f32 %v499, %v616
    %v621 = vmul.f32 %v503, %v616
    %v622 = vmul.f32 %v507, %v616
    %v623 = vmul.f32 %v511, %v616
    %v624 = vmul.f32 %v515, %v616
    %v625 = vmul.f32 %v519, %v616
    %v626 = vmul.f32 %v523, %v616
    %v627 = vmul.f32 %v527, %v616
    %v628 = vmul.f32 %v531, %v616
    %v629 = vmul.f32 %v535, %v616
    %v630 = vmul.f32 %v539, %v616
    %v631 = vmul.f32 %v543, %v616
    %v632 = vmul.f32 %v547, %v616
    %v633 = vmul.f32 %v551, %v616
    %v634 = vmul.f32 %v555, %v616
    %v635 = vmul.f32 %v559, %v616
    %v636 = vmul.f32 %v563, %v616
    %v637 = vmul.f32 %v567, %v616
    %v638 = vmul.f32 %v571, %v616
    %v639 = vmul.f32 %v575, %v616
    %v640 = vmul.f32 %v579, %v616
    %v641 = vmul.f32 %v583, %v616
    %v642 = vmul.f32 %v587, %v616
    %v643 = vmul.f32 %v591, %v616
    %v644 = vmul.f32 %v595, %v616
    %v645 = vmul.f32 %v599, %v616
    %v646 = vmul.f32 %v603, %v616
    %v647 = vmul.f32 %v607, %v616
    %v648 = vmul.f32 %v611, %v616
    %v649 = vadd.f32 %v453, %v617
    %v650 = vadd.f32 %v454, %v618
    %v651 = vadd.f32 %v455, %v619
    %v652 = vadd.f32 %v456, %v620
    %v653 = vadd.f32 %v457, %v621
    %v654 = vadd.f32 %v458, %v622
    %v655 = vadd.f32 %v459, %v623
    %v656 = vadd.f32 %v460, %v624
    %v657 = vadd.f32 %v461, %v625
    %v658 = vadd.f32 %v462, %v626
    %v659 = vadd.f32 %v463, %v627
    %v660 = vadd.f32 %v464, %v628
    %v661 = vadd.f32 %v465, %v629
    %v662 = vadd.f32 %v466, %v630
    %v663 = vadd.f32 %v467, %v631
    %v664 = vadd.f32 %v468, %v632
    %v665 = vadd.f32 %v469, %v633
    %v666 = vadd.f32 %v470, %v634
    %v667 = vadd.f32 %v471, %v635
    %v668 = vadd.f32 %v472, %v636
    %v669 = vadd.f32 %v473, %v637
    %v670 = vadd.f32 %v474, %v638
    %v671 = vadd.f32 %v475, %v639
    %v672 = vadd.f32 %v476, %v640
    %v673 = vadd.f32 %v477, %v641
    %v674 = vadd.f32 %v478, %v642
    %v675 = vadd.f32 %v479, %v643
    %v676 = vadd.f32 %v480, %v644
    %v677 = vadd.f32 %v481, %v645
    %v678 = vadd.f32 %v482, %v646
    %v679 = vadd.f32 %v483, %v647
    %v680 = vadd.f32 %v484, %v648
    %681 = vset.pattern.permute.xlu0 3
    %682 = vperm.xlu0 %681, %v21
    %v683 = vpop.permute.xlu0 %682
    %685 = vset.pattern.permute.xlu0 3
    %686 = vperm.xlu0 %685, %v22
    %v687 = vpop.permute.xlu0 %686
    %689 = vset.pattern.permute.xlu0 3
    %690 = vperm.xlu0 %689, %v23
    %v691 = vpop.permute.xlu0 %690
    %693 = vset.pattern.permute.xlu0 3
    %694 = vperm.xlu0 %693, %v24
    %v695 = vpop.permute.xlu0 %694
    %697 = vset.pattern.permute.xlu0 3
    %698 = vperm.xlu0 %697, %v25
    %v699 = vpop.permute.xlu0 %698
    %701 = vset.pattern.permute.xlu0 3
    %702 = vperm.xlu0 %701, %v26
    %v703 = vpop.permute.xlu0 %702
    %705 = vset.pattern.permute.xlu0 3
    %706 = vperm.xlu0 %705, %v27
    %v707 = vpop.permute.xlu0 %706
    %709 = vset.pattern.permute.xlu0 3
    %710 = vperm.xlu0 %709, %v28
    %v711 = vpop.permute.xlu0 %710
    %713 = vset.pattern.permute.xlu0 3
    %714 = vperm.xlu0 %713, %v29
    %v715 = vpop.permute.xlu0 %714
    %717 = vset.pattern.permute.xlu0 3
    %718 = vperm.xlu0 %717, %v30
    %v719 = vpop.permute.xlu0 %718
    %721 = vset.pattern.permute.xlu0 3
    %722 = vperm.xlu0 %721, %v31
    %v723 = vpop.permute.xlu0 %722
    %725 = vset.pattern.permute.xlu0 3
    %726 = vperm.xlu0 %725, %v32
    %v727 = vpop.permute.xlu0 %726
    %729 = vset.pattern.permute.xlu0 3
    %730 = vperm.xlu0 %729, %v33
    %v731 = vpop.permute.xlu0 %730
    %733 = vset.pattern.permute.xlu0 3
    %734 = vperm.xlu0 %733, %v34
    %v735 = vpop.permute.xlu0 %734
    %737 = vset.pattern.permute.xlu0 3
    %738 = vperm.xlu0 %737, %v35
    %v739 = vpop.permute.xlu0 %738
    %741 = vset.pattern.permute.xlu0 3
    %742 = vperm.xlu0 %741, %v36
    %v743 = vpop.permute.xlu0 %742
    %745 = vset.pattern.permute.xlu0 3
    %746 = vperm.xlu0 %745, %v37
    %v747 = vpop.permute.xlu0 %746
    %749 = vset.pattern.permute.xlu0 3
    %750 = vperm.xlu0 %749, %v38
    %v751 = vpop.permute.xlu0 %750
    %753 = vset.pattern.permute.xlu0 3
    %754 = vperm.xlu0 %753, %v39
    %v755 = vpop.permute.xlu0 %754
    %757 = vset.pattern.permute.xlu0 3
    %758 = vperm.xlu0 %757, %v40
    %v759 = vpop.permute.xlu0 %758
    %761 = vset.pattern.permute.xlu0 3
    %762 = vperm.xlu0 %761, %v41
    %v763 = vpop.permute.xlu0 %762
    %765 = vset.pattern.permute.xlu0 3
    %766 = vperm.xlu0 %765, %v42
    %v767 = vpop.permute.xlu0 %766
    %769 = vset.pattern.permute.xlu0 3
    %770 = vperm.xlu0 %769, %v43
    %v771 = vpop.permute.xlu0 %770
    %773 = vset.pattern.permute.xlu0 3
    %774 = vperm.xlu0 %773, %v44
    %v775 = vpop.permute.xlu0 %774
    %777 = vset.pattern.permute.xlu0 3
    %778 = vperm.xlu0 %777, %v45
    %v779 = vpop.permute.xlu0 %778
    %781 = vset.pattern.permute.xlu0 3
    %782 = vperm.xlu0 %781, %v46
    %v783 = vpop.permute.xlu0 %782
    %785 = vset.pattern.permute.xlu0 3
    %786 = vperm.xlu0 %785, %v47
    %v787 = vpop.permute.xlu0 %786
    %789 = vset.pattern.permute.xlu0 3
    %790 = vperm.xlu0 %789, %v48
    %v791 = vpop.permute.xlu0 %790
    %793 = vset.pattern.permute.xlu0 3
    %794 = vperm.xlu0 %793, %v49
    %v795 = vpop.permute.xlu0 %794
    %797 = vset.pattern.permute.xlu0 3
    %798 = vperm.xlu0 %797, %v50
    %v799 = vpop.permute.xlu0 %798
    %801 = vset.pattern.permute.xlu0 3
    %802 = vperm.xlu0 %801, %v51
    %v803 = vpop.permute.xlu0 %802
    %805 = vset.pattern.permute.xlu0 3
    %806 = vperm.xlu0 %805, %v52
    %v807 = vpop.permute.xlu0 %806
    %v809 = vlaneseq
    %v810 = vshrl.u32 %v809, 7
    %v811 = vsub.s32 3, %v810
    %v812 = vrot.slane %v53, %v811
    %v813 = vmul.f32 %v683, %v812
    %v814 = vmul.f32 %v687, %v812
    %v815 = vmul.f32 %v691, %v812
    %v816 = vmul.f32 %v695, %v812
    %v817 = vmul.f32 %v699, %v812
    %v818 = vmul.f32 %v703, %v812
    %v819 = vmul.f32 %v707, %v812
    %v820 = vmul.f32 %v711, %v812
    %v821 = vmul.f32 %v715, %v812
    %v822 = vmul.f32 %v719, %v812
    %v823 = vmul.f32 %v723, %v812
    %v824 = vmul.f32 %v727, %v812
    %v825 = vmul.f32 %v731, %v812
    %v826 = vmul.f32 %v735, %v812
    %v827 = vmul.f32 %v739, %v812
    %v828 = vmul.f32 %v743, %v812
    %v829 = vmul.f32 %v747, %v812
    %v830 = vmul.f32 %v751, %v812
    %v831 = vmul.f32 %v755, %v812
    %v832 = vmul.f32 %v759, %v812
    %v833 = vmul.f32 %v763, %v812
    %v834 = vmul.f32 %v767, %v812
    %v835 = vmul.f32 %v771, %v812
    %v836 = vmul.f32 %v775, %v812
    %v837 = vmul.f32 %v779, %v812
    %v838 = vmul.f32 %v783, %v812
    %v839 = vmul.f32 %v787, %v812
    %v840 = vmul.f32 %v791, %v812
    %v841 = vmul.f32 %v795, %v812
    %v842 = vmul.f32 %v799, %v812
    %v843 = vmul.f32 %v803, %v812
    %v844 = vmul.f32 %v807, %v812
    %v845 = vadd.f32 %v649, %v813
    %v846 = vadd.f32 %v650, %v814
    %v847 = vadd.f32 %v651, %v815
    %v848 = vadd.f32 %v652, %v816
    %v849 = vadd.f32 %v653, %v817
    %v850 = vadd.f32 %v654, %v818
    %v851 = vadd.f32 %v655, %v819
    %v852 = vadd.f32 %v656, %v820
    %v853 = vadd.f32 %v657, %v821
    %v854 = vadd.f32 %v658, %v822
    %v855 = vadd.f32 %v659, %v823
    %v856 = vadd.f32 %v660, %v824
    %v857 = vadd.f32 %v661, %v825
    %v858 = vadd.f32 %v662, %v826
    %v859 = vadd.f32 %v663, %v827
    %v860 = vadd.f32 %v664, %v828
    %v861 = vadd.f32 %v665, %v829
    %v862 = vadd.f32 %v666, %v830
    %v863 = vadd.f32 %v667, %v831
    %v864 = vadd.f32 %v668, %v832
    %v865 = vadd.f32 %v669, %v833
    %v866 = vadd.f32 %v670, %v834
    %v867 = vadd.f32 %v671, %v835
    %v868 = vadd.f32 %v672, %v836
    %v869 = vadd.f32 %v673, %v837
    %v870 = vadd.f32 %v674, %v838
    %v871 = vadd.f32 %v675, %v839
    %v872 = vadd.f32 %v676, %v840
    %v873 = vadd.f32 %v677, %v841
    %v874 = vadd.f32 %v678, %v842
    %v875 = vadd.f32 %v679, %v843
    %v876 = vadd.f32 %v680, %v844
    %v877 = vmax.f32 %v845, 0.0
    %v878 = vmax.f32 %v846, 0.0
    %v879 = vmax.f32 %v847, 0.0
    %v880 = vmax.f32 %v848, 0.0
    %v881 = vmax.f32 %v849, 0.0
    %v882 = vmax.f32 %v850, 0.0
    %v883 = vmax.f32 %v851, 0.0
    %v884 = vmax.f32 %v852, 0.0
    %v885 = vmax.f32 %v853, 0.0
    %v886 = vmax.f32 %v854, 0.0
    %v887 = vmax.f32 %v855, 0.0
    %v888 = vmax.f32 %v856, 0.0
    %v889 = vmax.f32 %v857, 0.0
    %v890 = vmax.f32 %v858, 0.0
    %v891 = vmax.f32 %v859, 0.0
    %v892 = vmax.f32 %v860, 0.0
    %v893 = vmax.f32 %v861, 0.0
    %v894 = vmax.f32 %v862, 0.0
    %v895 = vmax.f32 %v863, 0.0
    %v896 = vmax.f32 %v864, 0.0
    %v897 = vmax.f32 %v865, 0.0
    %v898 = vmax.f32 %v866, 0.0
    %v899 = vmax.f32 %v867, 0.0
    %v900 = vmax.f32 %v868, 0.0
    %v901 = vmax.f32 %v869, 0.0
    %v902 = vmax.f32 %v870, 0.0
    %v903 = vmax.f32 %v871, 0.0
    %v904 = vmax.f32 %v872, 0.0
    %v905 = vmax.f32 %v873, 0.0
    %v906 = vmax.f32 %v874, 0.0
    %v907 = vmax.f32 %v875, 0.0
    %v908 = vmax.f32 %v876, 0.0
    %v909 = vld [vmem:[%s3] sm:$0xff]
    %v910 = vld [vmem:[%s3 + $0x8] sm:$0xff]
    %v911 = vld [vmem:[%s3 + $0x10] sm:$0xff]
    %v912 = vld [vmem:[%s3 + $0x18] sm:$0xff]
    %v913 = vld [vmem:[%s3 + $0x20] sm:$0xff]
    %v914 = vld [vmem:[%s3 + $0x28] sm:$0xff]
    %v915 = vld [vmem:[%s3 + $0x30] sm:$0xff]
    %v916 = vld [vmem:[%s3 + $0x38] sm:$0xff]
    %v917 = vld [vmem:[%s3 + $0x40] sm:$0xff]
    %v918 = vld [vmem:[%s3 + $0x48] sm:$0xff]
    %v919 = vld [vmem:[%s3 + $0x50] sm:$0xff]
    %v920 = vld [vmem:[%s3 + $0x58] sm:$0xff]
    %v921 = vld [vmem:[%s3 + $0x60] sm:$0xff]
    %v922 = vld [vmem:[%s3 + $0x68] sm:$0xff]
    %v923 = vld [vmem:[%s3 + $0x70] sm:$0xff]
    %v924 = vld [vmem:[%s3 + $0x78] sm:$0xff]
    %s925 = sld [smem:[#allocation2]]
    %v926 = vstv %s925
    %927 = vmatprep.subr.mxu0 0.0
    %928 = vmatpush1.msra.mxu0 %v924
    %929 = vmatprep.subr.mxu0 0.0
    %930 = vmatpush1.msra.mxu0 %v923
    %931 = vmatprep.subr.mxu0 0.0
    %932 = vmatpush1.msra.mxu0 %v922
    %933 = vmatprep.subr.mxu0 0.0
    %934 = vmatpush1.msra.mxu0 %v921
    %935 = vmatprep.subr.mxu0 0.0
    %936 = vmatpush1.msra.mxu0 %v920
    %937 = vmatprep.subr.mxu0 0.0
    %938 = vmatpush1.msra.mxu0 %v919
    %939 = vmatprep.subr.mxu0 0.0
    %940 = vmatpush1.msra.mxu0 %v918
    %941 = vmatprep.subr.mxu0 0.0
    %942 = vmatpush1.msra.mxu0 %v917
    %943 = vmatprep.subr.mxu0 0.0
    %944 = vmatpush1.msra.mxu0 %v916
    %945 = vmatprep.subr.mxu0 0.0
    %946 = vmatpush1.msra.mxu0 %v915
    %947 = vmatprep.subr.mxu0 0.0
    %948 = vmatpush1.msra.mxu0 %v914
    %949 = vmatprep.subr.mxu0 0.0
    %950 = vmatpush1.msra.mxu0 %v913
    %951 = vmatprep.subr.mxu0 0.0
    %952 = vmatpush1.msra.mxu0 %v912
    %953 = vmatprep.subr.mxu0 0.0
    %954 = vmatpush1.msra.mxu0 %v911
    %955 = vmatprep.subr.mxu0 0.0
    %956 = vmatpush1.msra.mxu0 %v910
    %957 = vmatprep.subr.mxu0 0.0
    %958 = vmatpush1.msra.mxu0 %v909
    %959 = vmatprep.subr.mxu0 0.0
    %960 = vmatpush2.msra.mxu0 0.0
    %961 = vmatprep.subr.mxu0 0.0
    %962 = vmatpush2.msra.mxu0 0.0
    %963 = vmatprep.subr.mxu0 0.0
    %964 = vmatpush2.msra.mxu0 0.0
    %965 = vmatprep.subr.mxu0 0.0
    %966 = vmatpush2.msra.mxu0 0.0
    %967 = vmatprep.subr.mxu0 0.0
    %968 = vmatpush2.msra.mxu0 0.0
    %969 = vmatprep.subr.mxu0 0.0
    %970 = vmatpush2.msra.mxu0 0.0
    %971 = vmatprep.subr.mxu0 0.0
    %972 = vmatpush2.msra.mxu0 0.0
    %973 = vmatprep.subr.mxu0 0.0
    %974 = vmatpush2.msra.mxu0 0.0
    %975 = vmatprep.subr.mxu0 0.0
    %976 = vmatpush2.msra.mxu0 0.0
    %977 = vmatprep.subr.mxu0 0.0
    %978 = vmatpush2.msra.mxu0 0.0
    %979 = vmatprep.subr.mxu0 0.0
    %980 = vmatpush2.msra.mxu0 0.0
    %981 = vmatprep.subr.mxu0 0.0
    %982 = vmatpush2.msra.mxu0 0.0
    %983 = vmatprep.subr.mxu0 0.0
    %984 = vmatpush2.msra.mxu0 0.0
    %985 = vmatprep.subr.mxu0 0.0
    %986 = vmatpush2.msra.mxu0 0.0
    %987 = vmatprep.subr.mxu0 0.0
    %988 = vmatpush2.msra.mxu0 0.0
    %989 = vmatprep.subr.mxu0 0.0
    %990 = vmatpush2.msra.mxu0 0.0
    %991 = vmatprep.mubr.f32.mxu0 0.0
    %992 = vmatmul.mubr.f32.gmra.mxu0 %v877
    %v993 = vpop.f32.mrf.mxu0
    %v994 = vadd.f32 %v926, %v993
    %v995 = vpop.f32.mrf.mxu0
    %996 = vmatprep.mubr.f32.mxu0 0.0
    %997 = vmatmul.mubr.f32.gmra.mxu0 %v878
    %v998 = vpop.f32.mrf.mxu0
    %v999 = vadd.f32 %v926, %v998
    %v1000 = vpop.f32.mrf.mxu0
    %1001 = vmatprep.mubr.f32.mxu0 0.0
    %1002 = vmatmul.mubr.f32.gmra.mxu0 %v879
    %v1003 = vpop.f32.mrf.mxu0
    %v1004 = vadd.f32 %v926, %v1003
    %v1005 = vpop.f32.mrf.mxu0
    %1006 = vmatprep.mubr.f32.mxu0 0.0
    %1007 = vmatmul.mubr.f32.gmra.mxu0 %v880
    %v1008 = vpop.f32.mrf.mxu0
    %v1009 = vadd.f32 %v926, %v1008
    %v1010 = vpop.f32.mrf.mxu0
    %1011 = vmatprep.mubr.f32.mxu0 0.0
    %1012 = vmatmul.mubr.f32.gmra.mxu0 %v881
    %v1013 = vpop.f32.mrf.mxu0
    %v1014 = vadd.f32 %v926, %v1013
    %v1015 = vpop.f32.mrf.mxu0
    %1016 = vmatprep.mubr.f32.mxu0 0.0
    %1017 = vmatmul.mubr.f32.gmra.mxu0 %v882
    %v1018 = vpop.f32.mrf.mxu0
    %v1019 = vadd.f32 %v926, %v1018
    %v1020 = vpop.f32.mrf.mxu0
    %1021 = vmatprep.mubr.f32.mxu0 0.0
    %1022 = vmatmul.mubr.f32.gmra.mxu0 %v883
    %v1023 = vpop.f32.mrf.mxu0
    %v1024 = vadd.f32 %v926, %v1023
    %v1025 = vpop.f32.mrf.mxu0
    %1026 = vmatprep.mubr.f32.mxu0 0.0
    %1027 = vmatmul.mubr.f32.gmra.mxu0 %v884
    %v1028 = vpop.f32.mrf.mxu0
    %v1029 = vadd.f32 %v926, %v1028
    %v1030 = vpop.f32.mrf.mxu0
    %1031 = vmatprep.mubr.f32.mxu0 0.0
    %1032 = vmatmul.mubr.f32.gmra.mxu0 %v885
    %v1033 = vpop.f32.mrf.mxu0
    %v1034 = vadd.f32 %v926, %v1033
    %v1035 = vpop.f32.mrf.mxu0
    %1036 = vmatprep.mubr.f32.mxu0 0.0
    %1037 = vmatmul.mubr.f32.gmra.mxu0 %v886
    %v1038 = vpop.f32.mrf.mxu0
    %v1039 = vadd.f32 %v926, %v1038
    %v1040 = vpop.f32.mrf.mxu0
    %1041 = vmatprep.mubr.f32.mxu0 0.0
    %1042 = vmatmul.mubr.f32.gmra.mxu0 %v887
    %v1043 = vpop.f32.mrf.mxu0
    %v1044 = vadd.f32 %v926, %v1043
    %v1045 = vpop.f32.mrf.mxu0
    %1046 = vmatprep.mubr.f32.mxu0 0.0
    %1047 = vmatmul.mubr.f32.gmra.mxu0 %v888
    %v1048 = vpop.f32.mrf.mxu0
    %v1049 = vadd.f32 %v926, %v1048
    %v1050 = vpop.f32.mrf.mxu0
    %1051 = vmatprep.mubr.f32.mxu0 0.0
    %1052 = vmatmul.mubr.f32.gmra.mxu0 %v889
    %v1053 = vpop.f32.mrf.mxu0
    %v1054 = vadd.f32 %v926, %v1053
    %v1055 = vpop.f32.mrf.mxu0
    %1056 = vmatprep.mubr.f32.mxu0 0.0
    %1057 = vmatmul.mubr.f32.gmra.mxu0 %v890
    %v1058 = vpop.f32.mrf.mxu0
    %v1059 = vadd.f32 %v926, %v1058
    %v1060 = vpop.f32.mrf.mxu0
    %1061 = vmatprep.mubr.f32.mxu0 0.0
    %1062 = vmatmul.mubr.f32.gmra.mxu0 %v891
    %v1063 = vpop.f32.mrf.mxu0
    %v1064 = vadd.f32 %v926, %v1063
    %v1065 = vpop.f32.mrf.mxu0
    %1066 = vmatprep.mubr.f32.mxu0 0.0
    %1067 = vmatmul.mubr.f32.gmra.mxu0 %v892
    %v1068 = vpop.f32.mrf.mxu0
    %v1069 = vadd.f32 %v926, %v1068
    %v1070 = vpop.f32.mrf.mxu0
    %1071 = vmatprep.mubr.f32.mxu0 0.0
    %1072 = vmatmul.mubr.f32.gmra.mxu0 %v893
    %v1073 = vpop.f32.mrf.mxu0
    %v1074 = vadd.f32 %v926, %v1073
    %v1075 = vpop.f32.mrf.mxu0
    %1076 = vmatprep.mubr.f32.mxu0 0.0
    %1077 = vmatmul.mubr.f32.gmra.mxu0 %v894
    %v1078 = vpop.f32.mrf.mxu0
    %v1079 = vadd.f32 %v926, %v1078
    %v1080 = vpop.f32.mrf.mxu0
    %1081 = vmatprep.mubr.f32.mxu0 0.0
    %1082 = vmatmul.mubr.f32.gmra.mxu0 %v895
    %v1083 = vpop.f32.mrf.mxu0
    %v1084 = vadd.f32 %v926, %v1083
    %v1085 = vpop.f32.mrf.mxu0
    %1086 = vmatprep.mubr.f32.mxu0 0.0
    %1087 = vmatmul.mubr.f32.gmra.mxu0 %v896
    %v1088 = vpop.f32.mrf.mxu0
    %v1089 = vadd.f32 %v926, %v1088
    %v1090 = vpop.f32.mrf.mxu0
    %1091 = vmatprep.mubr.f32.mxu0 0.0
    %1092 = vmatmul.mubr.f32.gmra.mxu0 %v897
    %v1093 = vpop.f32.mrf.mxu0
    %v1094 = vadd.f32 %v926, %v1093
    %v1095 = vpop.f32.mrf.mxu0
    %1096 = vmatprep.mubr.f32.mxu0 0.0
    %1097 = vmatmul.mubr.f32.gmra.mxu0 %v898
    %v1098 = vpop.f32.mrf.mxu0
    %v1099 = vadd.f32 %v926, %v1098
    %v1100 = vpop.f32.mrf.mxu0
    %1101 = vmatprep.mubr.f32.mxu0 0.0
    %1102 = vmatmul.mubr.f32.gmra.mxu0 %v899
    %v1103 = vpop.f32.mrf.mxu0
    %v1104 = vadd.f32 %v926, %v1103
    %v1105 = vpop.f32.mrf.mxu0
    %1106 = vmatprep.mubr.f32.mxu0 0.0
    %1107 = vmatmul.mubr.f32.gmra.mxu0 %v900
    %v1108 = vpop.f32.mrf.mxu0
    %v1109 = vadd.f32 %v926, %v1108
    %v1110 = vpop.f32.mrf.mxu0
    %1111 = vmatprep.mubr.f32.mxu0 0.0
    %1112 = vmatmul.mubr.f32.gmra.mxu0 %v901
    %v1113 = vpop.f32.mrf.mxu0
    %v1114 = vadd.f32 %v926, %v1113
    %v1115 = vpop.f32.mrf.mxu0
    %1116 = vmatprep.mubr.f32.mxu0 0.0
    %1117 = vmatmul.mubr.f32.gmra.mxu0 %v902
    %v1118 = vpop.f32.mrf.mxu0
    %v1119 = vadd.f32 %v926, %v1118
    %v1120 = vpop.f32.mrf.mxu0
    %1121 = vmatprep.mubr.f32.mxu0 0.0
    %1122 = vmatmul.mubr.f32.gmra.mxu0 %v903
    %v1123 = vpop.f32.mrf.mxu0
    %v1124 = vadd.f32 %v926, %v1123
    %v1125 = vpop.f32.mrf.mxu0
    %1126 = vmatprep.mubr.f32.mxu0 0.0
    %1127 = vmatmul.mubr.f32.gmra.mxu0 %v904
    %v1128 = vpop.f32.mrf.mxu0
    %v1129 = vadd.f32 %v926, %v1128
    %v1130 = vpop.f32.mrf.mxu0
    %1131 = vmatprep.mubr.f32.mxu0 0.0
    %1132 = vmatmul.mubr.f32.gmra.mxu0 %v905
    %v1133 = vpop.f32.mrf.mxu0
    %v1134 = vadd.f32 %v926, %v1133
    %v1135 = vpop.f32.mrf.mxu0
    %1136 = vmatprep.mubr.f32.mxu0 0.0
    %1137 = vmatmul.mubr.f32.gmra.mxu0 %v906
    %v1138 = vpop.f32.mrf.mxu0
    %v1139 = vadd.f32 %v926, %v1138
    %v1140 = vpop.f32.mrf.mxu0
    %1141 = vmatprep.mubr.f32.mxu0 0.0
    %1142 = vmatmul.mubr.f32.gmra.mxu0 %v907
    %v1143 = vpop.f32.mrf.mxu0
    %v1144 = vadd.f32 %v926, %v1143
    %v1145 = vpop.f32.mrf.mxu0
    %1146 = vmatprep.mubr.f32.mxu0 0.0
    %1147 = vmatmul.mubr.f32.gmra.mxu0 %v908
    %v1148 = vpop.f32.mrf.mxu0
    %v1149 = vadd.f32 %v926, %v1148
    %v1150 = vpop.f32.mrf.mxu0
    %1151 = vdwg.mxu0
    %vm1152 = vcmask 7168
    %1153 = vst.msk [vmem:[#allocation3] sm:$0xff] %vm1152, %v994
    %1154 = vst.msk [vmem:[#allocation3 + $0x8] sm:$0xff] %vm1152, %v999
    %1155 = vst.msk [vmem:[#allocation3 + $0x10] sm:$0xff] %vm1152, %v1004
    %1156 = vst.msk [vmem:[#allocation3 + $0x18] sm:$0xff] %vm1152, %v1009
    %1157 = vst.msk [vmem:[#allocation3 + $0x20] sm:$0xff] %vm1152, %v1014
    %1158 = vst.msk [vmem:[#allocation3 + $0x28] sm:$0xff] %vm1152, %v1019
    %1159 = vst.msk [vmem:[#allocation3 + $0x30] sm:$0xff] %vm1152, %v1024
    %1160 = vst.msk [vmem:[#allocation3 + $0x38] sm:$0xff] %vm1152, %v1029
    %1161 = vst.msk [vmem:[#allocation3 + $0x40] sm:$0xff] %vm1152, %v1034
    %1162 = vst.msk [vmem:[#allocation3 + $0x48] sm:$0xff] %vm1152, %v1039
    %1163 = vst.msk [vmem:[#allocation3 + $0x50] sm:$0xff] %vm1152, %v1044
    %1164 = vst.msk [vmem:[#allocation3 + $0x58] sm:$0xff] %vm1152, %v1049
    %1165 = vst.msk [vmem:[#allocation3 + $0x60] sm:$0xff] %vm1152, %v1054
    %1166 = vst.msk [vmem:[#allocation3 + $0x68] sm:$0xff] %vm1152, %v1059
    %1167 = vst.msk [vmem:[#allocation3 + $0x70] sm:$0xff] %vm1152, %v1064
    %1168 = vst.msk [vmem:[#allocation3 + $0x78] sm:$0xff] %vm1152, %v1069
    %1169 = vst.msk [vmem:[#allocation3 + $0x80] sm:$0xff] %vm1152, %v1074
    %1170 = vst.msk [vmem:[#allocation3 + $0x88] sm:$0xff] %vm1152, %v1079
    %1171 = vst.msk [vmem:[#allocation3 + $0x90] sm:$0xff] %vm1152, %v1084
    %1172 = vst.msk [vmem:[#allocation3 + $0x98] sm:$0xff] %vm1152, %v1089
    %1173 = vst.msk [vmem:[#allocation3 + $0xa0] sm:$0xff] %vm1152, %v1094
    %1174 = vst.msk [vmem:[#allocation3 + $0xa8] sm:$0xff] %vm1152, %v1099
    %1175 = vst.msk [vmem:[#allocation3 + $0xb0] sm:$0xff] %vm1152, %v1104
    %1176 = vst.msk [vmem:[#allocation3 + $0xb8] sm:$0xff] %vm1152, %v1109
    %1177 = vst.msk [vmem:[#allocation3 + $0xc0] sm:$0xff] %vm1152, %v1114
    %1178 = vst.msk [vmem:[#allocation3 + $0xc8] sm:$0xff] %vm1152, %v1119
    %1179 = vst.msk [vmem:[#allocation3 + $0xd0] sm:$0xff] %vm1152, %v1124
    %1180 = vst.msk [vmem:[#allocation3 + $0xd8] sm:$0xff] %vm1152, %v1129
    %1181 = vst.msk [vmem:[#allocation3 + $0xe0] sm:$0xff] %vm1152, %v1134
    %1182 = vst.msk [vmem:[#allocation3 + $0xe8] sm:$0xff] %vm1152, %v1139
    %1183 = vst.msk [vmem:[#allocation3 + $0xf0] sm:$0xff] %vm1152, %v1144
    %1184 = vst.msk [vmem:[#allocation3 + $0xf8] sm:$0xff] %vm1152, %v1149
    // Predicated region
    $region22: #{tpu_custom_call.1} parent=1 // pred_check
      _
    $region23: #{tpu_custom_call.1} parent=1 // pred_check_branch
      %1186 = sbr.rel (0) target = $region25
    $region24: #{tpu_custom_call.1} parent=1 // pred_region
      // Predicated region
      $region26: #{tpu_custom_call.1} parent=24 // pred_check
        _
      $region27: #{tpu_custom_call.1} parent=24 // pred_check_branch
        %1188 = sbr.rel (0) target = $region29
      $region28: #{tpu_custom_call.1} parent=24 // pred_region
        // Predicated region
        $region30: #{tpu_custom_call.1} parent=28 // pred_check
          _
        $region31: #{tpu_custom_call.1} parent=28 // pred_check_branch
          %1190 = sbr.rel (0) target = $region33
        $region32: #{tpu_custom_call.1} parent=28 // pred_region
          // Predicated region
          $region45: #{tpu_custom_call.1} parent=32 // pred_check
            _
          $region46: #{tpu_custom_call.1} parent=32 // pred_check_branch
            %1254 = sbr.rel (0) target = $region48
          $region47: #{tpu_custom_call.1} parent=32 // pred_region
            loop: start=0, step=1, limit=1
            $region49: #{tpu_custom_call.1} parent=47 // loop_pre_header
              _
            $region50: #{tpu_custom_call.1} parent=47 // loop_header
              %s1256 = sphi 0, %s1260
              %p1257 = scmp.ge.s32.totalorder %s1256, 1
              %s1261 = sphi [#allocation3], [#allocation3]
              %s1262 = sphi %s5, %s5
            $region51: #{tpu_custom_call.1} parent=47 // loop_header_branch
              %1259 = sbr.rel (%p1257) target = $region55
            $region52: #{tpu_custom_call.1} parent=47 // loop_body
              %v1263 = vld [vmem:[%s1261] sm:$0xff]
              %1264 = vst [vmem:[%s1262] sm:$0xff] %v1263
              %v1265 = vld [vmem:[%s1261 + $0x8] sm:$0xff]
              %1266 = vst [vmem:[%s1262 + $0x8] sm:$0xff] %v1265
              %v1267 = vld [vmem:[%s1261 + $0x10] sm:$0xff]
              %1268 = vst [vmem:[%s1262 + $0x10] sm:$0xff] %v1267
              %v1269 = vld [vmem:[%s1261 + $0x18] sm:$0xff]
              %1270 = vst [vmem:[%s1262 + $0x18] sm:$0xff] %v1269
              %v1271 = vld [vmem:[%s1261 + $0x20] sm:$0xff]
              %1272 = vst [vmem:[%s1262 + $0x20] sm:$0xff] %v1271
              %v1273 = vld [vmem:[%s1261 + $0x28] sm:$0xff]
              %1274 = vst [vmem:[%s1262 + $0x28] sm:$0xff] %v1273
              %v1275 = vld [vmem:[%s1261 + $0x30] sm:$0xff]
              %1276 = vst [vmem:[%s1262 + $0x30] sm:$0xff] %v1275
              %v1277 = vld [vmem:[%s1261 + $0x38] sm:$0xff]
              %1278 = vst [vmem:[%s1262 + $0x38] sm:$0xff] %v1277
              %v1279 = vld [vmem:[%s1261 + $0x40] sm:$0xff]
              %1280 = vst [vmem:[%s1262 + $0x40] sm:$0xff] %v1279
              %v1281 = vld [vmem:[%s1261 + $0x48] sm:$0xff]
              %1282 = vst [vmem:[%s1262 + $0x48] sm:$0xff] %v1281
              %v1283 = vld [vmem:[%s1261 + $0x50] sm:$0xff]
              %1284 = vst [vmem:[%s1262 + $0x50] sm:$0xff] %v1283
              %v1285 = vld [vmem:[%s1261 + $0x58] sm:$0xff]
              %1286 = vst [vmem:[%s1262 + $0x58] sm:$0xff] %v1285
              %v1287 = vld [vmem:[%s1261 + $0x60] sm:$0xff]
              %1288 = vst [vmem:[%s1262 + $0x60] sm:$0xff] %v1287
              %v1289 = vld [vmem:[%s1261 + $0x68] sm:$0xff]
              %1290 = vst [vmem:[%s1262 + $0x68] sm:$0xff] %v1289
              %v1291 = vld [vmem:[%s1261 + $0x70] sm:$0xff]
              %1292 = vst [vmem:[%s1262 + $0x70] sm:$0xff] %v1291
              %v1293 = vld [vmem:[%s1261 + $0x78] sm:$0xff]
              %1294 = vst [vmem:[%s1262 + $0x78] sm:$0xff] %v1293
              %v1295 = vld [vmem:[%s1261 + $0x80] sm:$0xff]
              %1296 = vst [vmem:[%s1262 + $0x80] sm:$0xff] %v1295
              %v1297 = vld [vmem:[%s1261 + $0x88] sm:$0xff]
              %1298 = vst [vmem:[%s1262 + $0x88] sm:$0xff] %v1297
              %v1299 = vld [vmem:[%s1261 + $0x90] sm:$0xff]
              %1300 = vst [vmem:[%s1262 + $0x90] sm:$0xff] %v1299
              %v1301 = vld [vmem:[%s1261 + $0x98] sm:$0xff]
              %1302 = vst [vmem:[%s1262 + $0x98] sm:$0xff] %v1301
              %v1303 = vld [vmem:[%s1261 + $0xa0] sm:$0xff]
              %1304 = vst [vmem:[%s1262 + $0xa0] sm:$0xff] %v1303
              %v1305 = vld [vmem:[%s1261 + $0xa8] sm:$0xff]
              %1306 = vst [vmem:[%s1262 + $0xa8] sm:$0xff] %v1305
              %v1307 = vld [vmem:[%s1261 + $0xb0] sm:$0xff]
              %1308 = vst [vmem:[%s1262 + $0xb0] sm:$0xff] %v1307
              %v1309 = vld [vmem:[%s1261 + $0xb8] sm:$0xff]
              %1310 = vst [vmem:[%s1262 + $0xb8] sm:$0xff] %v1309
              %v1311 = vld [vmem:[%s1261 + $0xc0] sm:$0xff]
              %1312 = vst [vmem:[%s1262 + $0xc0] sm:$0xff] %v1311
            $region53: #{tpu_custom_call.1} parent=47 // loop_footer
              %s1260 = sadd.s32 1, %s1256
            $region54: #{tpu_custom_call.1} parent=47 // loop_footer_branch
              %1255 = sbr.rel target = $region50
            $region55: #{tpu_custom_call.1} parent=47 // loop_exit
              _
          $region48: #{tpu_custom_call.1} parent=32 // pred_fallthru
            _
          // Predicated region
          $region56: #{tpu_custom_call.1} parent=32 // pred_check
            _
          $region57: #{tpu_custom_call.1} parent=32 // pred_check_branch
            %1314 = sbr.rel target = $region59
          $region58: #{tpu_custom_call.1} parent=32 // pred_region
            _
          $region59: #{tpu_custom_call.1} parent=32 // pred_fallthru
            _
        $region33: #{tpu_custom_call.1} parent=28 // pred_fallthru
          _
        // Predicated region
        $region34: #{tpu_custom_call.1} parent=28 // pred_check
          _
        $region35: #{tpu_custom_call.1} parent=28 // pred_check_branch
          %1192 = sbr.rel target = $region37
        $region36: #{tpu_custom_call.1} parent=28 // pred_region
          %s1194 = ssub.s32 256, 1
          loop: start=0, step=1, limit=1
          $region38: #{tpu_custom_call.1} parent=36 // loop_pre_header
            _
          $region39: #{tpu_custom_call.1} parent=36 // loop_header
            %s1196 = sphi 0, %s1200
            %p1197 = scmp.ge.s32.totalorder %s1196, 1
            %s1201 = sphi [#allocation3], [#allocation3]
            %s1202 = sphi %s5, %s5
          $region40: #{tpu_custom_call.1} parent=36 // loop_header_branch
            %1199 = sbr.rel (%p1197) target = $region44
          $region41: #{tpu_custom_call.1} parent=36 // loop_body
            %v1203 = vld [vmem:[%s1201] sm:%s1194]
            %1204 = vst [vmem:[%s1202] sm:%s1194] %v1203
            %v1205 = vld [vmem:[%s1201 + $0x8] sm:%s1194]
            %1206 = vst [vmem:[%s1202 + $0x8] sm:%s1194] %v1205
            %v1207 = vld [vmem:[%s1201 + $0x10] sm:%s1194]
            %1208 = vst [vmem:[%s1202 + $0x10] sm:%s1194] %v1207
            %v1209 = vld [vmem:[%s1201 + $0x18] sm:%s1194]
            %1210 = vst [vmem:[%s1202 + $0x18] sm:%s1194] %v1209
            %v1211 = vld [vmem:[%s1201 + $0x20] sm:%s1194]
            %1212 = vst [vmem:[%s1202 + $0x20] sm:%s1194] %v1211
            %v1213 = vld [vmem:[%s1201 + $0x28] sm:%s1194]
            %1214 = vst [vmem:[%s1202 + $0x28] sm:%s1194] %v1213
            %v1215 = vld [vmem:[%s1201 + $0x30] sm:%s1194]
            %1216 = vst [vmem:[%s1202 + $0x30] sm:%s1194] %v1215
            %v1217 = vld [vmem:[%s1201 + $0x38] sm:%s1194]
            %1218 = vst [vmem:[%s1202 + $0x38] sm:%s1194] %v1217
            %v1219 = vld [vmem:[%s1201 + $0x40] sm:%s1194]
            %1220 = vst [vmem:[%s1202 + $0x40] sm:%s1194] %v1219
            %v1221 = vld [vmem:[%s1201 + $0x48] sm:%s1194]
            %1222 = vst [vmem:[%s1202 + $0x48] sm:%s1194] %v1221
            %v1223 = vld [vmem:[%s1201 + $0x50] sm:%s1194]
            %1224 = vst [vmem:[%s1202 + $0x50] sm:%s1194] %v1223
            %v1225 = vld [vmem:[%s1201 + $0x58] sm:%s1194]
            %1226 = vst [vmem:[%s1202 + $0x58] sm:%s1194] %v1225
            %v1227 = vld [vmem:[%s1201 + $0x60] sm:%s1194]
            %1228 = vst [vmem:[%s1202 + $0x60] sm:%s1194] %v1227
            %v1229 = vld [vmem:[%s1201 + $0x68] sm:%s1194]
            %1230 = vst [vmem:[%s1202 + $0x68] sm:%s1194] %v1229
            %v1231 = vld [vmem:[%s1201 + $0x70] sm:%s1194]
            %1232 = vst [vmem:[%s1202 + $0x70] sm:%s1194] %v1231
            %v1233 = vld [vmem:[%s1201 + $0x78] sm:%s1194]
            %1234 = vst [vmem:[%s1202 + $0x78] sm:%s1194] %v1233
            %v1235 = vld [vmem:[%s1201 + $0x80] sm:%s1194]
            %1236 = vst [vmem:[%s1202 + $0x80] sm:%s1194] %v1235
            %v1237 = vld [vmem:[%s1201 + $0x88] sm:%s1194]
            %1238 = vst [vmem:[%s1202 + $0x88] sm:%s1194] %v1237
            %v1239 = vld [vmem:[%s1201 + $0x90] sm:%s1194]
            %1240 = vst [vmem:[%s1202 + $0x90] sm:%s1194] %v1239
            %v1241 = vld [vmem:[%s1201 + $0x98] sm:%s1194]
            %1242 = vst [vmem:[%s1202 + $0x98] sm:%s1194] %v1241
            %v1243 = vld [vmem:[%s1201 + $0xa0] sm:%s1194]
            %1244 = vst [vmem:[%s1202 + $0xa0] sm:%s1194] %v1243
            %v1245 = vld [vmem:[%s1201 + $0xa8] sm:%s1194]
            %1246 = vst [vmem:[%s1202 + $0xa8] sm:%s1194] %v1245
            %v1247 = vld [vmem:[%s1201 + $0xb0] sm:%s1194]
            %1248 = vst [vmem:[%s1202 + $0xb0] sm:%s1194] %v1247
            %v1249 = vld [vmem:[%s1201 + $0xb8] sm:%s1194]
            %1250 = vst [vmem:[%s1202 + $0xb8] sm:%s1194] %v1249
            %v1251 = vld [vmem:[%s1201 + $0xc0] sm:%s1194]
            %1252 = vst [vmem:[%s1202 + $0xc0] sm:%s1194] %v1251
          $region42: #{tpu_custom_call.1} parent=36 // loop_footer
            %s1200 = sadd.s32 1, %s1196
          $region43: #{tpu_custom_call.1} parent=36 // loop_footer_branch
            %1195 = sbr.rel target = $region39
          $region44: #{tpu_custom_call.1} parent=36 // loop_exit
            _
        $region37: #{tpu_custom_call.1} parent=28 // pred_fallthru
          _
      $region29: #{tpu_custom_call.1} parent=24 // pred_fallthru
        _
      %1315 = vnop
    $region25: #{tpu_custom_call.1} parent=1 // pred_fallthru
      _
    // Predicated region
    $region60: #{tpu_custom_call.1} parent=1 // pred_check
      _
    $region61: #{tpu_custom_call.1} parent=1 // pred_check_branch
      %1317 = sbr.rel (0) target = $region63
    $region62: #{tpu_custom_call.1} parent=1 // pred_region
      _
    $region63: #{tpu_custom_call.1} parent=1 // pred_fallthru
      _

</llo_original>
